<compile_context>
chip_gen: v5e
topology: v5e:2x2
jax: 0.10.0
libtpu: 0.0.40
codegen_flags: <defaults>
</compile_context>

<pallas_src>
import jax
import jax.numpy as jnp
from jax.experimental import pallas as pl
from jax.experimental.pallas import tpu as pltpu


def _round_up(a, b):
    return ((a + b - 1) // b) * b


def _make_kernel(c, use_mxu):
    if use_mxu:
        def kernel(x_ref, w_ref, b_ref, o_ref):
            # x_ref: (1, C, TS)  w_ref: (C, C)  b_ref: (C, 1)
            x = x_ref[0]                                         # (C, TS) native dtype
            y = jnp.dot(w_ref[...], x, preferred_element_type=jnp.float32)
            y = y + b_ref[...].astype(jnp.float32)               # lane-broadcast bias
            o_ref[0] = (y + x.astype(jnp.float32)).astype(o_ref.dtype)
        return kernel

    def kernel(x_ref, w_ref, b_ref, o_ref):
        # Small-C path: stay on the VPU, lane axis = spatial (lane-dense).
        xf = x_ref[0].astype(jnp.float32)                        # (C, TS), cast once
        wf = w_ref[...].astype(jnp.float32)                      # (C, C)
        y = xf + b_ref[...].astype(jnp.float32)                  # residual + bias
        for i in range(c):                                       # unrolled, C is tiny
            y = y + wf[:, i:i + 1] * xf[i:i + 1, :]              # (C,1)*(1,TS) FMA
        o_ref[0] = y.astype(o_ref.dtype)
    return kernel


def residual_conv1x1(x_nchw, weight, bias, *, target_block_bytes=2 << 20):
    """Computes Conv2d(C->C, kernel=1)(x) + x for NCHW input via Pallas."""
    n, c, h, w = x_nchw.shape
    assert weight.shape == (c, c)
    assert bias.shape == (c,)

    s = h * w
    x3 = x_nchw.reshape(n, c, s)                 # free: NCHW is already (N, C, H*W)
    b_col = bias.reshape(c, 1)                   # broadcasts over the lane axis

    itemsize = x_nchw.dtype.itemsize

    # Spatial (lane) tile: multiple of 128, sized so each input block is ~2 MiB
    # (amortizes per-step overhead on this HBM-bound op), capped by VMEM budget.
    ts = max(128, (target_block_bytes // (c * itemsize)) // 128 * 128)
    ts = min(ts, _round_up(s, 128))

    def vmem_estimate(t):
        return (4 * c * t * itemsize                     # in + out, double-buffered
                + 3 * c * t * 4                          # f32 temporaries in the kernel
                + 2 * (c * c + c) * weight.dtype.itemsize)

    budget = 40 * 1024 * 1024                    # leaves headroom on v7x (64 MiB VMEM)
    while ts > 128 and vmem_estimate(ts) > budget:
        ts = max(128, (ts // 2) // 128 * 128)

    grid = (n, pl.cdiv(s, ts))                   # tail tile handled by Pallas masking
    vmem_limit = int(min(max(vmem_estimate(ts) + (4 << 20), 32 << 20), 48 << 20))

    kernel = _make_kernel(c, use_mxu=(c >= 32))

    out3 = pl.pallas_call(
        kernel,
        out_shape=jax.ShapeDtypeStruct((n, c, s), x_nchw.dtype),
        grid_spec=pltpu.PrefetchScalarGridSpec(
            num_scalar_prefetch=0,
            grid=grid,
            in_specs=[
                pl.BlockSpec((1, c, ts), lambda b, si: (b, 0, si)),
                pl.BlockSpec((c, c), lambda b, si: (0, 0)),
                pl.BlockSpec((c, 1), lambda b, si: (0, 0)),
            ],
            out_specs=pl.BlockSpec((1, c, ts), lambda b, si: (b, 0, si)),
        ),
        compiler_params=pltpu.CompilerParams(
            dimension_semantics=("parallel", "parallel"),
            vmem_limit_bytes=vmem_limit,
        ),
    )(x3, weight, b_col)

    return out3.reshape(n, c, h, w)


if __name__ == "__main__":
    key = jax.random.PRNGKey(0)
    kx, kw, kb = jax.random.split(key, 3)

    N, C, H, W = 2, 4, 16, 16
    x = jax.random.normal(kx, (N, C, H, W), dtype=jnp.float32)
    weight = jax.random.normal(kw, (C, C), dtype=jnp.float32) * 0.1
    bias = jax.random.normal(kb, (C,), dtype=jnp.float32) * 0.1

    out = residual_conv1x1(x, weight, bias)
    out = jax.block_until_ready(out)

    # Pure-JAX reference: fn(x) + x with fn = 1x1 conv.
    ref = jnp.einsum("oc,nchw->nohw", weight, x) + bias[None, :, None, None] + x
    assert out.shape == x.shape and out.dtype == x.dtype
    assert jnp.allclose(out, ref, atol=1e-5, rtol=1e-5), "mismatch vs reference"

    print("KERNEL_OK")
</pallas_src>

<mosaic_0001>
module attributes {stable_mosaic.version = 11 : i64} {
  func.func @kernel(%arg0: i32, %arg1: i32, %arg2: memref<1x4x256xf32, #tpu.memory_space<vmem>>, %arg3: memref<4x4xf32, #tpu.memory_space<vmem>>, %arg4: memref<4x1xf32, #tpu.memory_space<vmem>>, %arg5: memref<1x4x256xf32, #tpu.memory_space<vmem>>) attributes {dimension_semantics = [#tpu.dimension_semantics<parallel>, #tpu.dimension_semantics<parallel>], iteration_bounds = array<i64: 2, 1>, scalar_prefetch = 0 : i64, scratch_operands = 0 : i64, tpu.core_type = #tpu.core_type<tc>, window_params = [{transform_indices = @transform_0, window_bounds = array<i64: 1, 4, 256>}, {pipeline_mode = #tpu.pipeline_mode<synchronous>, transform_indices = @transform_1, window_bounds = array<i64: 4, 4>}, {pipeline_mode = #tpu.pipeline_mode<synchronous>, transform_indices = @transform_2, window_bounds = array<i64: 4, 1>}, {transform_indices = @transform_3, window_bounds = array<i64: 1, 4, 256>}]} {
    %c0 = arith.constant 0 : index
    %c0_0 = arith.constant 0 : index
    %c0_1 = arith.constant 0 : index
    %0 = vector.load %arg2[%c0, %c0_0, %c0_1] : memref<1x4x256xf32, #tpu.memory_space<vmem>>, vector<1x4x256xf32>
    %1 = vector.shape_cast %0 : vector<1x4x256xf32> to vector<4x256xf32>
    %c0_2 = arith.constant 0 : index
    %c0_3 = arith.constant 0 : index
    %2 = vector.load %arg3[%c0_2, %c0_3] : memref<4x4xf32, #tpu.memory_space<vmem>>, vector<4x4xf32>
    %c0_4 = arith.constant 0 : index
    %c0_5 = arith.constant 0 : index
    %3 = vector.load %arg4[%c0_4, %c0_5] : memref<4x1xf32, #tpu.memory_space<vmem>>, vector<4x1xf32>
    %4 = vector.broadcast %3 : vector<4x1xf32> to vector<4x256xf32>
    %5 = arith.addf %1, %4 : vector<4x256xf32>
    %6 = vector.extract_strided_slice %2 {offsets = [0, 0], sizes = [4, 1], strides = [1, 1]} : vector<4x4xf32> to vector<4x1xf32>
    %7 = vector.extract_strided_slice %1 {offsets = [0, 0], sizes = [1, 256], strides = [1, 1]} : vector<4x256xf32> to vector<1x256xf32>
    %8 = vector.broadcast %6 : vector<4x1xf32> to vector<4x256xf32>
    %9 = vector.broadcast %7 : vector<1x256xf32> to vector<4x256xf32>
    %10 = arith.mulf %8, %9 : vector<4x256xf32>
    %11 = arith.addf %5, %10 : vector<4x256xf32>
    %12 = vector.extract_strided_slice %2 {offsets = [0, 1], sizes = [4, 1], strides = [1, 1]} : vector<4x4xf32> to vector<4x1xf32>
    %13 = vector.extract_strided_slice %1 {offsets = [1, 0], sizes = [1, 256], strides = [1, 1]} : vector<4x256xf32> to vector<1x256xf32>
    %14 = vector.broadcast %12 : vector<4x1xf32> to vector<4x256xf32>
    %15 = vector.broadcast %13 : vector<1x256xf32> to vector<4x256xf32>
    %16 = arith.mulf %14, %15 : vector<4x256xf32>
    %17 = arith.addf %11, %16 : vector<4x256xf32>
    %18 = vector.extract_strided_slice %2 {offsets = [0, 2], sizes = [4, 1], strides = [1, 1]} : vector<4x4xf32> to vector<4x1xf32>
    %19 = vector.extract_strided_slice %1 {offsets = [2, 0], sizes = [1, 256], strides = [1, 1]} : vector<4x256xf32> to vector<1x256xf32>
    %20 = vector.broadcast %18 : vector<4x1xf32> to vector<4x256xf32>
    %21 = vector.broadcast %19 : vector<1x256xf32> to vector<4x256xf32>
    %22 = arith.mulf %20, %21 : vector<4x256xf32>
    %23 = arith.addf %17, %22 : vector<4x256xf32>
    %24 = vector.extract_strided_slice %2 {offsets = [0, 3], sizes = [4, 1], strides = [1, 1]} : vector<4x4xf32> to vector<4x1xf32>
    %25 = vector.extract_strided_slice %1 {offsets = [3, 0], sizes = [1, 256], strides = [1, 1]} : vector<4x256xf32> to vector<1x256xf32>
    %26 = vector.broadcast %24 : vector<4x1xf32> to vector<4x256xf32>
    %27 = vector.broadcast %25 : vector<1x256xf32> to vector<4x256xf32>
    %28 = arith.mulf %26, %27 : vector<4x256xf32>
    %29 = arith.addf %23, %28 : vector<4x256xf32>
    %c0_6 = arith.constant 0 : index
    %c0_7 = arith.constant 0 : index
    %c0_8 = arith.constant 0 : index
    %30 = vector.load %arg5[%c0_6, %c0_7, %c0_8] : memref<1x4x256xf32, #tpu.memory_space<vmem>>, vector<1x4x256xf32>
    %31 = vector.shape_cast %30 : vector<1x4x256xf32> to vector<4x256xf32>
    %32 = vector.shape_cast %29 : vector<4x256xf32> to vector<1x4x256xf32>
    tpu.vector_store %arg5[%c0_6, %c0_7, %c0_8], %32 {strides = array<i32>} : memref<1x4x256xf32, #tpu.memory_space<vmem>>, vector<1x4x256xf32>,
    return
  }
  func.func @transform_0(%arg0: i32, %arg1: i32) -> (i32, i32, i32) {
    %c0_i32 = arith.constant 0 : i32
    %c0_i32_0 = arith.constant 0 : i32
    return %arg0, %c0_i32, %arg1 : i32, i32, i32
  }
  func.func @transform_1(%arg0: i32, %arg1: i32) -> (i32, i32) {
    %c0_i32 = arith.constant 0 : i32
    %c0_i32_0 = arith.constant 0 : i32
    %c0_i32_1 = arith.constant 0 : i32
    return %c0_i32, %c0_i32_0 : i32, i32
  }
  func.func @transform_2(%arg0: i32, %arg1: i32) -> (i32, i32) {
    %c0_i32 = arith.constant 0 : i32
    %c0_i32_0 = arith.constant 0 : i32
    %c0_i32_1 = arith.constant 0 : i32
    return %c0_i32, %c0_i32_0 : i32, i32
  }
  func.func @transform_3(%arg0: i32, %arg1: i32) -> (i32, i32, i32) {
    %c0_i32 = arith.constant 0 : i32
    %c0_i32_0 = arith.constant 0 : i32
    return %arg0, %c0_i32, %arg1 : i32, i32, i32
  }
}

</mosaic_0001>

<llo_original>
// kernel: tpu_custom_call.1
$region0: #{tpu_custom_call.1}
  #allocation0 [shape = 'u32[]', space=smem, size = 0x4, offset = 0x4, fixed_abs, tag = 'smem constant byte address 0x4 - core index']
  #allocation1 [shape = 'u32[72,128]{1,0:T(1,128)}', space=vmem, size = 0x9000, scoped, tag = 'internal scratch']
  %s0 = inlined_call_operand.hbm [shape: f32[2,4,256], index: 0, kind: input, shape index: {}]
  %s1 = inlined_call_operand.vmem [shape: f32[4,4], index: 1, kind: input, shape index: {}]
  %s2 = inlined_call_operand.vmem [shape: f32[4,1], index: 2, kind: input, shape index: {}]
  %s3 = inlined_call_operand.hbm [shape: f32[2,4,256], index: 3, kind: output, shape index: {}]
  %s4 = sld [smem:[#allocation0]]
  $region49: #{tpu_custom_call.1} parent=0
    _
  %s6 = ssub.s32 1, %s4
  %s7 = scalar_select 0, %s6, %s4
  $region1: #{tpu_custom_call.1} parent=0
    #allocation2 [shape = 'u8[8192]{0}', space=vmem, size = 0x2000, scoped, tag = 'input window, operand 0']
    #allocation3 [shape = 's32[2]{0}', space=sflag, size = 0x8, scoped, tag = 'scoped memory for tpu_custom_call.1']
    #allocation4 [shape = 's32[2]{0}', space=sflag, size = 0x8, scoped, tag = 'scoped memory for tpu_custom_call.1']
    #allocation5 [shape = 'u8[8192]{0}', space=vmem, size = 0x2000, scoped, tag = 'output window, operand 0']
    %8 = vsyncpa [#allocation3], 0
    %s9 = scalar_lea.sflag [#allocation3], 1
    %10 = vsyncpa %s9, 0
    %11 = vsyncpa [#allocation4], 0
    %s12 = scalar_lea.sflag [#allocation4], 1
    %13 = vsyncpa %s12, 0
    loop: start=0, step=1, limit=4
    $region2: #{tpu_custom_call.1} parent=1 // loop_pre_header
      _
    $region3: #{tpu_custom_call.1} parent=1 // loop_header
      %s15 = sphi 0, %s19
      %p16 = scmp.ge.s32.totalorder %s15, 4
      %s22 = sphi 0, %s34
      %s23 = sphi 0, %s30
      %s24 = sphi 0, %s22
      %s25 = sphi 0, %s23
      %s26 = sphi 0, %s24
      %s27 = sphi 0, %s25
      %s39 = sphi 0, %s41
      %s42 = sphi 0, %s39
      %s43 = sphi 0, %s42
      %s59 = sphi 0, %s43
      %s63 = sphi 0, %s63
      %s65 = sphi 0, %s63
      %s66 = sphi 0, %s65
      %s80 = sphi 0, %s66
      %s84 = sphi 0, %s84
      %s86 = sphi 0, %s84
      %s87 = sphi 0, %s86
      %s101 = sphi 0, %s87
      %s109 = sphi 0, %s111
      %s112 = sphi 0, %s109
      %s113 = sphi 0, %s112
      %s129 = sphi 0, %s113
    $region4: #{tpu_custom_call.1} parent=1 // loop_header_branch
      %18 = sbr.rel (%p16) target = $region8
    $region5: #{tpu_custom_call.1} parent=1 // loop_body
      %s20 = ssub.s32 %s15, 1
      %s21 = ssub.s32 %s15, 2
      %s28 = sadd.s32 1, %s23
      %p29 = scmp.ge.s32.totalorder %s28, 1
      %s30 = scalar_select %p29, 0, %s28
      %s31 = sadd.s32 1, %s22
      %s32 = scalar_select %p29, %s31, %s22
      %p33 = scmp.ge.s32.totalorder %s32, 2
      %s34 = scalar_select %p33, 0, %s32
      %s35 = ssub.s32 %s22, %s34
      %s36 = ssub.s32 %s23, %s30
      %s37 = sor.u32 %s35, %s36
      %p38 = scmp.eq.s32.totalorder %s37, 0
      %s40 = sadd.s32 %s39, 1
      %s41 = scalar_select %p38, %s39, %s40
      %p44 = pneg %p38
      %p45 = scmp.eq.s32.totalorder %s15, 1
      %p46 = por %p44, %p45
      %p47 = scmp.ne.s32.totalorder %s39, %s42
      %p48 = scmp.eq.s32.totalorder %s15, 0
      %p49 = por %p47, %p48
      %p50 = scmp.ne.s32.totalorder %s39, %s42
      %p51 = scmp.eq.s32.totalorder %s20, 1
      %p52 = por %p50, %p51
      %p53 = scmp.ne.s32.totalorder %s42, %s43
      %p54 = scmp.eq.s32.totalorder %s20, 0
      %p55 = por %p53, %p54
      %p56 = scmp.ne.s32.totalorder %s42, %s43
      %p57 = scmp.eq.s32.totalorder %s21, 1
      %p58 = por %p56, %p57
      %p60 = scmp.ne.s32.totalorder %s43, %s59
      %p61 = scmp.eq.s32.totalorder %s21, 0
      %p62 = por %p60, %p61
      %s64 = sadd.s32 %s63, 1
      %p67 = scmp.eq.s32.totalorder %s15, 1
      %p68 = scmp.ne.s32.totalorder %s63, %s65
      %p69 = scmp.eq.s32.totalorder %s15, 0
      %p70 = por %p68, %p69
      %p71 = scmp.ne.s32.totalorder %s63, %s65
      %p72 = scmp.eq.s32.totalorder %s20, 1
      %p73 = por %p71, %p72
      %p74 = scmp.ne.s32.totalorder %s65, %s66
      %p75 = scmp.eq.s32.totalorder %s20, 0
      %p76 = por %p74, %p75
      %p77 = scmp.ne.s32.totalorder %s65, %s66
      %p78 = scmp.eq.s32.totalorder %s21, 1
      %p79 = por %p77, %p78
      %p81 = scmp.ne.s32.totalorder %s66, %s80
      %p82 = scmp.eq.s32.totalorder %s21, 0
      %p83 = por %p81, %p82
      %s85 = sadd.s32 %s84, 1
      %p88 = scmp.eq.s32.totalorder %s15, 1
      %p89 = scmp.ne.s32.totalorder %s84, %s86
      %p90 = scmp.eq.s32.totalorder %s15, 0
      %p91 = por %p89, %p90
      %p92 = scmp.ne.s32.totalorder %s84, %s86
      %p93 = scmp.eq.s32.totalorder %s20, 1
      %p94 = por %p92, %p93
      %p95 = scmp.ne.s32.totalorder %s86, %s87
      %p96 = scmp.eq.s32.totalorder %s20, 0
      %p97 = por %p95, %p96
      %p98 = scmp.ne.s32.totalorder %s86, %s87
      %p99 = scmp.eq.s32.totalorder %s21, 1
      %p100 = por %p98, %p99
      %p102 = scmp.ne.s32.totalorder %s87, %s101
      %p103 = scmp.eq.s32.totalorder %s21, 0
      %p104 = por %p102, %p103
      %s105 = ssub.s32 %s22, %s34
      %s106 = ssub.s32 %s23, %s30
      %s107 = sor.u32 %s105, %s106
      %p108 = scmp.eq.s32.totalorder %s107, 0
      %s110 = sadd.s32 %s109, 1
      %s111 = scalar_select %p108, %s109, %s110
      %p114 = pneg %p108
      %p115 = scmp.eq.s32.totalorder %s15, 1
      %p116 = por %p114, %p115
      %p117 = scmp.ne.s32.totalorder %s109, %s112
      %p118 = scmp.eq.s32.totalorder %s15, 0
      %p119 = por %p117, %p118
      %p120 = scmp.ne.s32.totalorder %s109, %s112
      %p121 = scmp.eq.s32.totalorder %s20, 1
      %p122 = por %p120, %p121
      %p123 = scmp.ne.s32.totalorder %s112, %s113
      %p124 = scmp.eq.s32.totalorder %s20, 0
      %p125 = por %p123, %p124
      %p126 = scmp.ne.s32.totalorder %s112, %s113
      %p127 = scmp.eq.s32.totalorder %s21, 1
      %p128 = por %p126, %p127
      %p130 = scmp.ne.s32.totalorder %s113, %s129
      %p131 = scmp.eq.s32.totalorder %s21, 0
      %p132 = por %p130, %p131
      %p133 = scmp.le.s32.totalorder 1, %s15
      %p134 = scmp.lt.s32.totalorder %s15, 3
      %p135 = pnand %p133, %p134
      %p136 = pneg %p135
      // Predicated region
      $region9: #{tpu_custom_call.1} parent=5 // pred_check
        _
      $region10: #{tpu_custom_call.1} parent=5 // pred_check_branch
        %138 = sbr.rel (%p135) target = $region12
      $region11: #{tpu_custom_call.1} parent=5 // pred_region
        %s139 = ssub.s32 %s15, 1
        // Predicated region
        $region13: #{tpu_custom_call.1} parent=11 // pred_check
          %p140 = pneg %p76
        $region14: #{tpu_custom_call.1} parent=11 // pred_check_branch
          %142 = sbr.rel (%p140) target = $region16
        $region15: #{tpu_custom_call.1} parent=11 // pred_region
          _
        $region16: #{tpu_custom_call.1} parent=11 // pred_fallthru
          _
        // Predicated region
        $region17: #{tpu_custom_call.1} parent=11 // pred_check
          %p143 = pneg %p97
        $region18: #{tpu_custom_call.1} parent=11 // pred_check_branch
          %145 = sbr.rel (%p143) target = $region20
        $region19: #{tpu_custom_call.1} parent=11 // pred_region
          _
        $region20: #{tpu_custom_call.1} parent=11 // pred_fallthru
          _
      $region12: #{tpu_custom_call.1} parent=5 // pred_fallthru
        _
      %p146 = scmp.lt.s32.totalorder %s15, 2
      // Predicated region
      $region21: #{tpu_custom_call.1} parent=5 // pred_check
        %p147 = pneg %p146
      $region22: #{tpu_custom_call.1} parent=5 // pred_check_branch
        %149 = sbr.rel (%p147) target = $region24
      $region23: #{tpu_custom_call.1} parent=5 // pred_region
        // Predicated region
        $region25: #{tpu_custom_call.1} parent=23 // pred_check
          %p150 = pneg %p49
        $region26: #{tpu_custom_call.1} parent=23 // pred_check_branch
          %152 = sbr.rel (%p150) target = $region28
        $region27: #{tpu_custom_call.1} parent=23 // pred_region
          %s153 = sand.u32 %s39, 1
          %s154 = scalar_lea.sflag [#allocation3], %s153
          %s155 = sand.u32 %s39, 1
          %s156 = smul.addr %s155, 8
          %s157 = scalar_lea.vmem [#allocation2], %s156
          %s158 = smul.u32 2, %s23
          %160 = vsyncadd %s154, 0
          %s161 = smul.addr %s22, 2
          %s162 = sadd.s32 %s158, %s161
          %s163 = smul.addr %s162, 4
          %s164 = scalar_lea.hbm %s0, %s163
          %s166 = sshll.u32 %s164, 4
          %s167 = int_to_ptr.hbm [resolvable:$true] %s166
          %s168 = sshll.u32 %s157, 4
          %s169 = int_to_ptr.vmem [resolvable:$true] %s168
          %171 = dma.hbm_to_vmem [thread:$0]  %s167, 128, %s169, %s154
        $region28: #{tpu_custom_call.1} parent=23 // pred_fallthru
          _
      $region24: #{tpu_custom_call.1} parent=5 // pred_fallthru
        _
      %p172 = scmp.le.s32.totalorder 1, %s15
      %p173 = scmp.lt.s32.totalorder %s15, 3
      %p174 = pnand %p172, %p173
      %p175 = pneg %p174
      // Predicated region
      $region29: #{tpu_custom_call.1} parent=5 // pred_check
        _
      $region30: #{tpu_custom_call.1} parent=5 // pred_check_branch
        %177 = sbr.rel (%p174) target = $region32
      $region31: #{tpu_custom_call.1} parent=5 // pred_region
        %s178 = ssub.s32 %s15, 1
        %s179 = sand.u32 %s42, 1
        %s180 = scalar_lea.sflag [#allocation3], %s179
        %s181 = sand.u32 %s42, 1
        %s182 = smul.addr %s181, 8
        %s183 = scalar_lea.vmem [#allocation2], %s182
        // Predicated region
        $region33: #{tpu_custom_call.1} parent=31 // pred_check
          %p184 = pneg %p55
        $region34: #{tpu_custom_call.1} parent=31 // pred_check_branch
          %186 = sbr.rel (%p184) target = $region36
        $region35: #{tpu_custom_call.1} parent=31 // pred_region
          %188 = dma.done %s180, 128
        $region36: #{tpu_custom_call.1} parent=31 // pred_fallthru
          _
        %s189 = sand.u32 %s42, 1
        %s190 = scalar_lea.sflag [#allocation3], %s189
        %s191 = sand.u32 %s42, 1
        %s192 = smul.addr %s191, 8
        %s193 = scalar_lea.vmem [#allocation2], %s192
        %p194 = pneg %p55
        %p195 = pneg %p52
        %p196 = pneg %p76
        %p197 = pneg %p73
        %p198 = pneg %p97
        %p199 = pneg %p94
        %p200 = pneg %p125
        %p201 = pneg %p122
        %s202 = sand.u32 %s112, 1
        %s203 = scalar_lea.sflag [#allocation4], %s202
        %s204 = sand.u32 %s112, 1
        %s205 = smul.addr %s204, 8
        %s206 = scalar_lea.vmem [#allocation5], %s205
        %s207 = smul.u32 2, %s25
        %s208 = smul.u32 2, %s25
        %v209 = vld [vmem:[%s183] sm:$0xff]
        %v210 = vld [vmem:[%s1] sm:$0xf]
        %v211 = vld [vmem:[%s2] sm:$0xf]
        %213 = vset.pattern.permute.xlu0 0
        %214 = vperm.xlu0 %213, %v211
        %v215 = vpop.permute.xlu0 %214
        %v217 = vunpack.c.l.s4 839922192
        %v218 = vunpack.c.0.s8 %v217
        %v219 = vperm.slane %v215, %v218
        %v221 = vadd.f32 %v209, %v219
        %223 = vset.pattern.permute.xlu0 0
        %224 = vperm.xlu0 %223, %v210
        %v225 = vpop.permute.xlu0 %224
        %v228 = vperm.slane %v209, 0
        %v229 = vperm.slane %v209, 4
        %v232 = vperm.slane %v228, 0
        %v233 = vperm.slane %v229, 0
        %v234 = vmul.f32 %v225, %v232
        %v235 = vmul.f32 %v225, %v233
        %v238 = vrot.slane %v235, 4
        %vm239 = vcmask 1043456
        %v240 = vsel %vm239, %v234, %v238
        %v242 = vadd.f32 %v221, %v240
        %243 = vset.pattern.permute.xlu0 1
        %244 = vperm.xlu0 %243, %v210
        %v245 = vpop.permute.xlu0 %244
        %v247 = vperm.slane %v209, 1
        %v248 = vperm.slane %v209, 5
        %v251 = vperm.slane %v247, 1
        %v252 = vperm.slane %v248, 1
        %v253 = vmul.f32 %v245, %v251
        %v254 = vmul.f32 %v245, %v252
        %v257 = vrot.slane %v254, 4
        %v258 = vsel %vm239, %v253, %v257
        %v260 = vadd.f32 %v242, %v258
        %261 = vset.pattern.permute.xlu0 2
        %262 = vperm.xlu0 %261, %v210
        %v263 = vpop.permute.xlu0 %262
        %v265 = vperm.slane %v209, 2
        %v266 = vperm.slane %v209, 6
        %v269 = vperm.slane %v265, 2
        %v270 = vperm.slane %v266, 2
        %v271 = vmul.f32 %v263, %v269
        %v272 = vmul.f32 %v263, %v270
        %v275 = vrot.slane %v272, 4
        %v276 = vsel %vm239, %v271, %v275
        %v278 = vadd.f32 %v260, %v276
        %279 = vset.pattern.permute.xlu0 3
        %280 = vperm.xlu0 %279, %v210
        %v281 = vpop.permute.xlu0 %280
        %v283 = vperm.slane %v209, 3
        %v284 = vperm.slane %v209, 7
        %v287 = vperm.slane %v283, 3
        %v288 = vperm.slane %v284, 3
        %v289 = vmul.f32 %v281, %v287
        %v290 = vmul.f32 %v281, %v288
        %v293 = vrot.slane %v290, 4
        %v294 = vsel %vm239, %v289, %v293
        %v296 = vadd.f32 %v278, %v294
        %297 = vst [vmem:[%s206] sm:$0xff] %v296
        %s298 = sand.u32 %s112, 1
        %s299 = scalar_lea.sflag [#allocation4], %s298
        %s300 = sand.u32 %s112, 1
        %s301 = smul.addr %s300, 8
        %s302 = scalar_lea.vmem [#allocation5], %s301
        // Predicated region
        $region37: #{tpu_custom_call.1} parent=31 // pred_check
          %p303 = pneg %p122
        $region38: #{tpu_custom_call.1} parent=31 // pred_check_branch
          %305 = sbr.rel (%p303) target = $region40
        $region39: #{tpu_custom_call.1} parent=31 // pred_region
          %s306 = smul.u32 2, %s25
          %308 = vsyncadd %s299, 0
          %s309 = smul.addr %s24, 2
          %s310 = sadd.s32 %s306, %s309
          %s311 = smul.addr %s310, 4
          %s312 = scalar_lea.hbm %s3, %s311
          %s314 = sshll.u32 %s302, 4
          %s315 = int_to_ptr.vmem [resolvable:$true] %s314
          %s316 = sshll.u32 %s312, 4
          %s317 = int_to_ptr.hbm [resolvable:$true] %s316
          %319 = dma.vmem_to_hbm [thread:$0]  %s315, 128, %s317, %s299
        $region40: #{tpu_custom_call.1} parent=31 // pred_fallthru
          _
      $region32: #{tpu_custom_call.1} parent=5 // pred_fallthru
        _
      %p320 = scmp.le.s32.totalorder 2, %s15
      // Predicated region
      $region41: #{tpu_custom_call.1} parent=5 // pred_check
        %p321 = pneg %p320
      $region42: #{tpu_custom_call.1} parent=5 // pred_check_branch
        %323 = sbr.rel (%p321) target = $region44
      $region43: #{tpu_custom_call.1} parent=5 // pred_region
        %s324 = ssub.s32 %s15, 2
        // Predicated region
        $region45: #{tpu_custom_call.1} parent=43 // pred_check
          %p325 = pneg %p128
        $region46: #{tpu_custom_call.1} parent=43 // pred_check_branch
          %327 = sbr.rel (%p325) target = $region48
        $region47: #{tpu_custom_call.1} parent=43 // pred_region
          %s328 = sand.u32 %s113, 1
          %s329 = scalar_lea.sflag [#allocation4], %s328
          %s330 = sand.u32 %s113, 1
          %s331 = smul.addr %s330, 8
          %s332 = scalar_lea.vmem [#allocation5], %s331
          %334 = dma.done %s329, 128
        $region48: #{tpu_custom_call.1} parent=43 // pred_fallthru
          _
      $region44: #{tpu_custom_call.1} parent=5 // pred_fallthru
        _
    $region6: #{tpu_custom_call.1} parent=1 // loop_footer
      %s19 = sadd.s32 1, %s15
    $region7: #{tpu_custom_call.1} parent=1 // loop_footer_branch
      %14 = sbr.rel target = $region3
    $region8: #{tpu_custom_call.1} parent=1 // loop_exit
      _
    %335 = vsyncpa [#allocation3], 1
    %s336 = scalar_lea.sflag [#allocation3], 1
    %337 = vsyncpa %s336, 1
    %338 = vsyncpa [#allocation4], 1
    %s339 = scalar_lea.sflag [#allocation4], 1
    %340 = vsyncpa %s339, 1

</llo_original>
